<compile_context>
chip_gen: v7x
topology: tpu7x:2x2x1
jax: 0.10.0
libtpu: 0.0.40
codegen_flags: <defaults>
</compile_context>

<pallas_src>
import functools

import numpy as np
import jax
import jax.numpy as jnp
from jax import lax
from jax.experimental import pallas as pl
from jax.experimental.pallas import tpu as pltpu

# ---------------------------------------------------------------------------
# Module configuration (mirrors the PyTorch file)
# ---------------------------------------------------------------------------
HIDDEN_SIZE = 768
LABEL_TYPES = [
    "O", "B-COURT", "I-COURT", "B-PETITIONER", "I-PETITIONER",
    "B-RESPONDENT", "I-RESPONDENT", "B-JUDGE", "I-JUDGE",
    "B-LAWYER", "I-LAWYER", "B-DATE", "I-DATE", "B-STATUTE", "I-STATUTE",
]
NUM_LABELS = len(LABEL_TYPES)          # 15
N_PAD = 128                            # lane-dense padded output width

# murmur3-style finalizer constants (int32 two's complement) — fallback path.
_MIX1 = np.int32(0x7FEB352D)
_MIX2 = np.int32(0x846CA68B - (1 << 32))
_GOLD = np.int32(0x9E3779B9 - (1 << 32))


def _signed_threshold(drop_p):
    """int32 threshold t such that P(uniform_int32 < t) == drop_p."""
    thr = int(round((drop_p - 0.5) * (1 << 32)))
    return np.int32(max(-(1 << 31), min(thr, (1 << 31) - 1)))


def _head_kernel(drop_p, tm, use_hw_prng, runtime_scale, seed_ref,
                 x_ref, w_ref, b_ref, o_ref):
    """One grid step: dropout + linear on a (tm, H) row tile.

    seed_ref : SMEM scalar-prefetch ref, shape (1,) int32
    x_ref    : (tm, H)      hidden-state row tile (f32 or bf16)
    w_ref    : (H, N_PAD)   transposed, zero-padded weight (compute dtype)
    b_ref    : (1, N_PAD)   zero-padded bias (float32)
    o_ref    : (tm, N_PAD)  output logits tile
    """
    x = x_ref[...]                                    # (tm, H)

    if drop_p > 0.0:
        thr = _signed_threshold(drop_p)
        if use_hw_prng:
            # Hardware PRNG: one seed per grid step, keyed on (seed, tile).
            pltpu.prng_seed(seed_ref[0], pl.program_id(0))
            bits = pltpu.prng_random_bits(x.shape)
            if bits.dtype != jnp.int32:               # raw bits: sign is irrelevant
                bits = pltpu.bitcast(bits, jnp.int32)
        else:
            # Fallback (interpret / non-TPU): counter-based integer hash.
            h = x.shape[1]
            row = lax.broadcasted_iota(jnp.int32, x.shape, 0)
            col = lax.broadcasted_iota(jnp.int32, x.shape, 1)
            idx = pl.program_id(0) * (tm * h) + row * h + col
            r = idx + seed_ref[0] * _GOLD
            r = r ^ ((r >> 16) & 0xFFFF)
            r = r * _MIX1
            r = r ^ ((r >> 15) & 0x1FFFF)
            r = r * _MIX2
            r = r ^ ((r >> 16) & 0xFFFF)
            bits = r
        keep = bits >= thr                            # keep prob = 1 - drop_p
        x = jnp.where(keep, x, jnp.zeros_like(x))

    # MXU matmul; compute dtype is carried by the prepared weight (bf16 by
    # default), accumulation is always f32.
    logits = jnp.dot(x.astype(w_ref.dtype), w_ref[...],
                     preferred_element_type=jnp.float32)
    if runtime_scale != 1.0:
        # 1/(1-p) rescale on the 128-wide logits (skipped when folded into w).
        logits = logits * np.float32(runtime_scale)
    o_ref[...] = (logits + b_ref[...]).astype(o_ref.dtype)


def prepare_params(weight, bias, *, compute_dtype=jnp.bfloat16,
                   fold_drop_p=None):
    """One-time packing of the nn.Linear parameters (do NOT call per step).

    weight      : (NUM_LABELS, H) torch nn.Linear layout -> (H, N_PAD)
                  lane-dense, zero-padded, cast to the MXU compute dtype.
    bias        : (NUM_LABELS,)  -> (1, N_PAD) float32, zero-padded.
    fold_drop_p : if set (and > 0), the 1/(1-p) dropout rescale is folded into
                  the packed weight; call the head with drop_scale_folded=True.
    """
    w = jnp.asarray(weight, jnp.float32).T            # (H, NUM_LABELS)
    if fold_drop_p:
        assert 0.0 <= fold_drop_p < 1.0
        w = w * np.float32(1.0 / (1.0 - fold_drop_p))
    w_t = jnp.zeros((HIDDEN_SIZE, N_PAD), compute_dtype)
    w_t = w_t.at[:, :NUM_LABELS].set(w.astype(compute_dtype))
    b_p = jnp.zeros((1, N_PAD), jnp.float32)
    b_p = b_p.at[0, :NUM_LABELS].set(jnp.asarray(bias, jnp.float32))
    return w_t, b_p


def _default_tm():
    """Generation-aware default row tile (fits default scoped VMEM everywhere)."""
    try:
        kind = jax.devices()[0].device_kind.lower()
    except Exception:
        return 1024
    if ("v6" in kind) or ("v7" in kind) or ("7x" in kind):
        return 2048        # ~14.5 MiB double-buffered, fits 32 MiB scoped VMEM
    return 1024            # safe inside v5e's 16 MiB default scoped VMEM


def _round_up(v, m):
    return -(-v // m) * m


def simple_linear_lner_head(hidden_states, w_t, b_p, *, drop_p=0.5, seed=0,
                            tm=None, drop_scale_folded=False,
                            padded_output=False, out_dtype=jnp.float32,
                            use_hw_prng=None):
    """Pallas implementation of SimpleLinearLNERHead.forward.

    hidden_states : (B, S, H) float32 or bfloat16 (bf16 accepted directly; do
                    not cast in the wrapper — that adds an HBM pass).
    w_t, b_p      : outputs of prepare_params()
    returns       : (B, S, NUM_LABELS), or (B, S, N_PAD) if padded_output=True
                    (avoids a separate slice/copy pass; downstream must mask).
    """
    B, S, H = hidden_states.shape
    assert H == HIDDEN_SIZE
    assert 0.0 <= drop_p < 1.0
    M = B * S
    x2d = hidden_states.reshape(M, H)        # no HBM pad/cast copy

    if use_hw_prng is None:
        # HW PRNG has no interpret/CPU lowering; select at trace time.
        use_hw_prng = (jax.default_backend() == "tpu")
    if tm is None:
        tm = _default_tm()

    # Row-tile alignment: 8 sublanes for 32-bit input, 16 for 16-bit input.
    align = 16 if jnp.dtype(hidden_states.dtype).itemsize == 2 else 8
    tm = max(align, (int(tm) // align) * align)
    tm_eff = min(tm, _round_up(M, align))
    # v7x megacore: keep the 1-D grid >= 2 steps when M allows, so both
    # TensorCores get work (harmless on single-TC v5e/v6e).
    if M > 2 * align:
        tm_eff = min(tm_eff, _round_up(-(-M // 2), align))
    grid = (pl.cdiv(M, tm_eff),)             # ragged last tile masked by Pallas

    runtime_scale = 1.0
    if drop_p > 0.0 and not drop_scale_folded:
        runtime_scale = 1.0 / (1.0 - drop_p)

    seed_arr = jnp.array([seed], dtype=jnp.int32)
    kernel = functools.partial(_head_kernel, float(drop_p), tm_eff,
                               bool(use_hw_prng), float(runtime_scale))

    cost = pl.CostEstimate(
        flops=2 * M * H * N_PAD,
        transcendentals=0,
        bytes_accessed=(M * H * x2d.dtype.itemsize
                        + M * N_PAD * jnp.dtype(out_dtype).itemsize
                        + H * N_PAD * w_t.dtype.itemsize + N_PAD * 4),
    )

    out = pl.pallas_call(
        kernel,
        out_shape=jax.ShapeDtypeStruct((M, N_PAD), out_dtype),
        grid_spec=pltpu.PrefetchScalarGridSpec(
            num_scalar_prefetch=1,
            grid=grid,
            in_specs=[
                pl.BlockSpec((tm_eff, H), lambda i, s: (i, 0)),
                pl.BlockSpec((H, N_PAD), lambda i, s: (0, 0)),   # resident weight
                pl.BlockSpec((1, N_PAD), lambda i, s: (0, 0)),   # resident bias
            ],
            out_specs=pl.BlockSpec((tm_eff, N_PAD), lambda i, s: (i, 0)),
        ),
        compiler_params=pltpu.CompilerParams(
            dimension_semantics=("parallel",)),
        cost_estimate=cost,
    )(seed_arr, x2d, w_t, b_p)

    if padded_output:
        return out.reshape(B, S, N_PAD)
    return out[:, :NUM_LABELS].reshape(B, S, NUM_LABELS)


if __name__ == "__main__":
    key = jax.random.PRNGKey(0)
    k_x, k_w, k_b = jax.random.split(key, 3)

    # Small example shapes: batch=2, seq=8, hidden=768 (fixed by the module).
    B, S = 2, 8
    x = jax.random.normal(k_x, (B, S, HIDDEN_SIZE), dtype=jnp.float32)

    # Deterministic parameter init (uniform, roughly torch nn.Linear scale).
    bound = 1.0 / (HIDDEN_SIZE ** 0.5)
    weight = jax.random.uniform(k_w, (NUM_LABELS, HIDDEN_SIZE),
                                minval=-bound, maxval=bound, dtype=jnp.float32)
    bias = jax.random.uniform(k_b, (NUM_LABELS,),
                              minval=-bound, maxval=bound, dtype=jnp.float32)

    # Parameter packing happens once, outside the forward pass.
    w_t, b_p = prepare_params(weight, bias)
    w_t_tr, b_p_tr = prepare_params(weight, bias, fold_drop_p=0.5)  # scale folded

    # 1) drop_p = 0.0 path: deterministic, verify against a pure-JAX reference.
    #    (bf16 MXU inputs with f32 accumulation -> loosened tolerance.)
    out_eval = simple_linear_lner_head(x, w_t, b_p, drop_p=0.0)
    out_eval = jax.block_until_ready(out_eval)
    ref = jnp.einsum("bsh,nh->bsn", x, weight) + bias
    assert out_eval.shape == (B, S, NUM_LABELS)
    assert jnp.allclose(out_eval, ref, atol=5e-2, rtol=5e-2), \
        float(jnp.max(jnp.abs(out_eval - ref)))

    # 2) drop_p = 0.5 path: hardware-PRNG dropout (stochastic; sanity check).
    out_train = simple_linear_lner_head(x, w_t, b_p, drop_p=0.5, seed=1234)
    out_train = jax.block_until_ready(out_train)
    assert out_train.shape == (B, S, NUM_LABELS)
    assert bool(jnp.all(jnp.isfinite(out_train)))
    # Dropout must actually perturb the logits.
    assert bool(jnp.any(jnp.abs(out_train - out_eval) > 1e-6))

    # 3) folded-rescale weights + same seed must reproduce the train logits
    #    (scale 2.0 is a power of two -> exact).
    out_train_f = simple_linear_lner_head(x, w_t_tr, b_p_tr, drop_p=0.5,
                                          seed=1234, drop_scale_folded=True)
    out_train_f = jax.block_until_ready(out_train_f)
    assert jnp.allclose(out_train_f, out_train, atol=1e-4), \
        float(jnp.max(jnp.abs(out_train_f - out_train)))

    # 4) padded-output fast path (no wrapper-side slice pass).
    out_pad = simple_linear_lner_head(x, w_t, b_p, drop_p=0.0,
                                      padded_output=True)
    out_pad = jax.block_until_ready(out_pad)
    assert out_pad.shape == (B, S, N_PAD)
    assert jnp.allclose(out_pad[..., :NUM_LABELS], out_eval, atol=1e-6)

    print("KERNEL_OK")
</pallas_src>

<mosaic_0001>
module attributes {stable_mosaic.version = 11 : i64} {
  func.func @_head_kernel(%arg0: i32, %arg1: memref<1xi32, #tpu.memory_space<smem>>, %arg2: memref<16x768xf32, #tpu.memory_space<vmem>>, %arg3: memref<768x128xbf16, #tpu.memory_space<vmem>>, %arg4: memref<1x128xf32, #tpu.memory_space<vmem>>, %arg5: memref<16x128xf32, #tpu.memory_space<vmem>>) attributes {dimension_semantics = [#tpu.dimension_semantics<parallel>], iteration_bounds = array<i64: 1>, scalar_prefetch = 1 : i64, scratch_operands = 0 : i64, tpu.core_type = #tpu.core_type<tc>, window_params = [{transform_indices = @transform_0, window_bounds = array<i64: 16, 768>}, {pipeline_mode = #tpu.pipeline_mode<synchronous>, transform_indices = @transform_1, window_bounds = array<i64: 768, 128>}, {pipeline_mode = #tpu.pipeline_mode<synchronous>, transform_indices = @transform_2, window_bounds = array<i64: 1, 128>}, {transform_indices = @transform_3, window_bounds = array<i64: 16, 128>}]} {
    %c0 = arith.constant 0 : index
    %c0_0 = arith.constant 0 : index
    %0 = vector.load %arg2[%c0, %c0_0] : memref<16x768xf32, #tpu.memory_space<vmem>>, vector<16x768xf32>
    %1 = arith.truncf %0 : vector<16x768xf32> to vector<16x768xbf16>
    %c0_1 = arith.constant 0 : index
    %c0_2 = arith.constant 0 : index
    %2 = vector.load %arg3[%c0_1, %c0_2] : memref<768x128xbf16, #tpu.memory_space<vmem>>, vector<768x128xbf16>
    %cst = arith.constant dense<0.000000e+00> : vector<16x128xf32>
    %3 = tpu.matmul %1, %2, %cst {dimension_numbers = #tpu.dot_dimension_numbers<[1], [0], [0], [1], [0, 0, 1, 1], [], []>} : vector<16x768xbf16>, vector<768x128xbf16>, vector<16x128xf32> -> vector<16x128xf32>
    %c0_3 = arith.constant 0 : index
    %c0_4 = arith.constant 0 : index
    %4 = vector.load %arg4[%c0_3, %c0_4] : memref<1x128xf32, #tpu.memory_space<vmem>>, vector<1x128xf32>
    %5 = vector.broadcast %4 : vector<1x128xf32> to vector<16x128xf32>
    %6 = arith.addf %3, %5 : vector<16x128xf32>
    %c0_5 = arith.constant 0 : index
    %c0_6 = arith.constant 0 : index
    %7 = vector.load %arg5[%c0_5, %c0_6] : memref<16x128xf32, #tpu.memory_space<vmem>>, vector<16x128xf32>
    tpu.vector_store %arg5[%c0_5, %c0_6], %6 {strides = array<i32>} : memref<16x128xf32, #tpu.memory_space<vmem>>, vector<16x128xf32>,
    return
  }
  func.func @transform_0(%arg0: i32, %arg1: memref<1xi32, #tpu.memory_space<smem>>) -> (i32, i32) {
    %c0_i32 = arith.constant 0 : i32
    %c0_i32_0 = arith.constant 0 : i32
    return %arg0, %c0_i32 : i32, i32
  }
  func.func @transform_1(%arg0: i32, %arg1: memref<1xi32, #tpu.memory_space<smem>>) -> (i32, i32) {
    %c0_i32 = arith.constant 0 : i32
    %c0_i32_0 = arith.constant 0 : i32
    %c0_i32_1 = arith.constant 0 : i32
    return %c0_i32, %c0_i32_0 : i32, i32
  }
  func.func @transform_2(%arg0: i32, %arg1: memref<1xi32, #tpu.memory_space<smem>>) -> (i32, i32) {
    %c0_i32 = arith.constant 0 : i32
    %c0_i32_0 = arith.constant 0 : i32
    %c0_i32_1 = arith.constant 0 : i32
    return %c0_i32, %c0_i32_0 : i32, i32
  }
  func.func @transform_3(%arg0: i32, %arg1: memref<1xi32, #tpu.memory_space<smem>>) -> (i32, i32) {
    %c0_i32 = arith.constant 0 : i32
    %c0_i32_0 = arith.constant 0 : i32
    return %arg0, %c0_i32 : i32, i32
  }
}

</mosaic_0001>

<llo_original>
// kernel: tpu_custom_call.1
$region0: #{tpu_custom_call.1}
  #allocation0 [shape = 'u32[]', space=smem, size = 0x4, offset = 0x4, fixed_abs, tag = 'smem constant byte address 0x4 - core index']
  #allocation1 [shape = 'u32[144,128]{1,0:T(1,128)}', space=vmem, size = 0x12000, scoped, tag = 'internal scratch']
  #allocation2 [shape = 's32[1]{0}', space=sflag, size = 0x4, scoped, tag = 'scoped memory for tpu_custom_call.1']
  #allocation3 [shape = 's32[1]{0:T(128)S(6)}', space=smem, size = 0x200, scoped, tag = 'prefetched SMEM operand 0']
  %s0 = inlined_call_operand.<no memory space> [shape: s32[1], index: 0, kind: input, shape index: {}]
  %s1 = inlined_call_operand.hbm [shape: f32[16,768], index: 1, kind: input, shape index: {}]
  %s2 = inlined_call_operand.hbm [shape: bf16[768,128], index: 2, kind: input, shape index: {}]
  %s3 = inlined_call_operand.vmem [shape: f32[1,128], index: 3, kind: input, shape index: {}]
  %s4 = inlined_call_operand.hbm [shape: f32[16,128], index: 4, kind: output, shape index: {}]
  %s5 = sld [smem:[#allocation0]]
  $region30: #{tpu_custom_call.1} parent=0
    _
  %s7 = ssub.s32 1, %s5
  %s8 = scalar_select 0, %s7, %s5
  %9 = sst [smem:[#allocation3]] %s0
  $region1: #{tpu_custom_call.1} parent=0
    #allocation4 [shape = 'u8[49152]{0}', space=vmem, size = 0xc000, scoped, tag = 'input window, operand 1, single buffered']
    #allocation5 [shape = 's32[1]{0}', space=sflag, size = 0x4, scoped, tag = 'scoped memory for tpu_custom_call.1']
    #allocation6 [shape = 's32[1]{0}', space=sflag, size = 0x4, scoped, tag = 'scoped memory for tpu_custom_call.1']
    #allocation7 [shape = 'u8[196608]{0}', space=vmem, size = 0x30000, scoped, tag = 'input window, operand 2, single buffered']
    #allocation8 [shape = 's32[1]{0}', space=sflag, size = 0x4, scoped, tag = 'scoped memory for tpu_custom_call.1']
    #allocation9 [shape = 'u8[8192]{0}', space=vmem, size = 0x2000, scoped, tag = 'output window, operand 0, single buffered']
    %10 = vsyncpa [#allocation5], 0
    %11 = vsyncpa [#allocation8], 0
    %12 = vsyncpa [#allocation6], 0
    // Predicated region
    $region2: #{tpu_custom_call.1} parent=1 // pred_check
      _
    $region3: #{tpu_custom_call.1} parent=1 // pred_check_branch
      %14 = sbr.rel (0) target = $region5
    $region4: #{tpu_custom_call.1} parent=1 // pred_region
      %s16 = ssub.s32 1536, 1536
      %17 = vsyncadd [#allocation5], %s16
      %s18 = sshll.u32 [#allocation4], 4
      %s19 = int_to_ptr.vmem [resolvable:$true] %s18
      %24 = dma.hbm_to_vmem [thread:$0]  %s1, 1536, %s19, [#allocation5], 768, 768, 48
    $region5: #{tpu_custom_call.1} parent=1 // pred_fallthru
      _
    // Predicated region
    $region6: #{tpu_custom_call.1} parent=1 // pred_check
      _
    $region7: #{tpu_custom_call.1} parent=1 // pred_check_branch
      %26 = sbr.rel (0) target = $region9
    $region8: #{tpu_custom_call.1} parent=1 // pred_region
      %s28 = ssub.s32 6144, 6144
      %29 = vsyncadd [#allocation8], %s28
      %s30 = sshll.u32 [#allocation7], 4
      %s31 = int_to_ptr.vmem [resolvable:$true] %s30
      %36 = dma.hbm_to_vmem [thread:$0]  %s2, 6144, %s31, [#allocation8], 64, 64, 4
    $region9: #{tpu_custom_call.1} parent=1 // pred_fallthru
      _
    // Predicated region
    $region10: #{tpu_custom_call.1} parent=1 // pred_check
      _
    $region11: #{tpu_custom_call.1} parent=1 // pred_check_branch
      %38 = sbr.rel (0) target = $region13
    $region12: #{tpu_custom_call.1} parent=1 // pred_region
      _
    $region13: #{tpu_custom_call.1} parent=1 // pred_fallthru
      _
    // Predicated region
    $region14: #{tpu_custom_call.1} parent=1 // pred_check
      _
    $region15: #{tpu_custom_call.1} parent=1 // pred_check_branch
      %40 = sbr.rel (0) target = $region17
    $region16: #{tpu_custom_call.1} parent=1 // pred_region
      %41 = dma.done [#allocation5], 1536
    $region17: #{tpu_custom_call.1} parent=1 // pred_fallthru
      _
    // Predicated region
    $region18: #{tpu_custom_call.1} parent=1 // pred_check
      _
    $region19: #{tpu_custom_call.1} parent=1 // pred_check_branch
      %43 = sbr.rel (0) target = $region21
    $region20: #{tpu_custom_call.1} parent=1 // pred_region
      %44 = dma.done [#allocation8], 6144
    $region21: #{tpu_custom_call.1} parent=1 // pred_fallthru
      _
    %v46 = vld [vmem:[#allocation4] sm:$0xff]
    %v47 = vld [vmem:[#allocation4 + $0x8] sm:$0xff]
    %v48 = vld [vmem:[#allocation4 + $0x10] sm:$0xff]
    %v49 = vld [vmem:[#allocation4 + $0x18] sm:$0xff]
    %v50 = vld [vmem:[#allocation4 + $0x20] sm:$0xff]
    %v51 = vld [vmem:[#allocation4 + $0x28] sm:$0xff]
    %v52 = vld [vmem:[#allocation4 + $0x30] sm:$0xff]
    %v53 = vld [vmem:[#allocation4 + $0x38] sm:$0xff]
    %v54 = vld [vmem:[#allocation4 + $0x40] sm:$0xff]
    %v55 = vld [vmem:[#allocation4 + $0x48] sm:$0xff]
    %v56 = vld [vmem:[#allocation4 + $0x50] sm:$0xff]
    %v57 = vld [vmem:[#allocation4 + $0x58] sm:$0xff]
    %v58 = vpack.c.bf16 %v52, %v46
    %v59 = vpack.c.bf16 %v53, %v47
    %v60 = vpack.c.bf16 %v54, %v48
    %v61 = vpack.c.bf16 %v55, %v49
    %v62 = vpack.c.bf16 %v56, %v50
    %v63 = vpack.c.bf16 %v57, %v51
    %v64 = vld [vmem:[#allocation7] sm:$0xf]
    %v65 = vld [vmem:[#allocation7 + $0x4] sm:$0xf]
    %v66 = vld [vmem:[#allocation7 + $0x8] sm:$0xf]
    %v67 = vld [vmem:[#allocation7 + $0xc] sm:$0xf]
    %v68 = vld [vmem:[#allocation7 + $0x10] sm:$0xf]
    %v69 = vld [vmem:[#allocation7 + $0x14] sm:$0xf]
    %v70 = vld [vmem:[#allocation7 + $0x18] sm:$0xf]
    %v71 = vld [vmem:[#allocation7 + $0x1c] sm:$0xf]
    %v72 = vld [vmem:[#allocation7 + $0x20] sm:$0xf]
    %v73 = vld [vmem:[#allocation7 + $0x24] sm:$0xf]
    %v74 = vld [vmem:[#allocation7 + $0x28] sm:$0xf]
    %v75 = vld [vmem:[#allocation7 + $0x2c] sm:$0xf]
    %v76 = vld [vmem:[#allocation7 + $0x30] sm:$0xf]
    %v77 = vld [vmem:[#allocation7 + $0x34] sm:$0xf]
    %v78 = vld [vmem:[#allocation7 + $0x38] sm:$0xf]
    %v79 = vld [vmem:[#allocation7 + $0x3c] sm:$0xf]
    %v80 = vld [vmem:[#allocation7 + $0x40] sm:$0xf]
    %v81 = vld [vmem:[#allocation7 + $0x44] sm:$0xf]
    %v82 = vld [vmem:[#allocation7 + $0x48] sm:$0xf]
    %v83 = vld [vmem:[#allocation7 + $0x4c] sm:$0xf]
    %v84 = vld [vmem:[#allocation7 + $0x50] sm:$0xf]
    %v85 = vld [vmem:[#allocation7 + $0x54] sm:$0xf]
    %v86 = vld [vmem:[#allocation7 + $0x58] sm:$0xf]
    %v87 = vld [vmem:[#allocation7 + $0x5c] sm:$0xf]
    %v88 = vld [vmem:[#allocation7 + $0x60] sm:$0xf]
    %v89 = vld [vmem:[#allocation7 + $0x64] sm:$0xf]
    %v90 = vld [vmem:[#allocation7 + $0x68] sm:$0xf]
    %v91 = vld [vmem:[#allocation7 + $0x6c] sm:$0xf]
    %v92 = vld [vmem:[#allocation7 + $0x70] sm:$0xf]
    %v93 = vld [vmem:[#allocation7 + $0x74] sm:$0xf]
    %v94 = vld [vmem:[#allocation7 + $0x78] sm:$0xf]
    %v95 = vld [vmem:[#allocation7 + $0x7c] sm:$0xf]
    %v96 = vld [vmem:[#allocation7 + $0x80] sm:$0xf]
    %v97 = vld [vmem:[#allocation7 + $0x84] sm:$0xf]
    %v98 = vld [vmem:[#allocation7 + $0x88] sm:$0xf]
    %v99 = vld [vmem:[#allocation7 + $0x8c] sm:$0xf]
    %v100 = vld [vmem:[#allocation7 + $0x90] sm:$0xf]
    %v101 = vld [vmem:[#allocation7 + $0x94] sm:$0xf]
    %v102 = vld [vmem:[#allocation7 + $0x98] sm:$0xf]
    %v103 = vld [vmem:[#allocation7 + $0x9c] sm:$0xf]
    %v104 = vld [vmem:[#allocation7 + $0xa0] sm:$0xf]
    %v105 = vld [vmem:[#allocation7 + $0xa4] sm:$0xf]
    %v106 = vld [vmem:[#allocation7 + $0xa8] sm:$0xf]
    %v107 = vld [vmem:[#allocation7 + $0xac] sm:$0xf]
    %v108 = vld [vmem:[#allocation7 + $0xb0] sm:$0xf]
    %v109 = vld [vmem:[#allocation7 + $0xb4] sm:$0xf]
    %v110 = vld [vmem:[#allocation7 + $0xb8] sm:$0xf]
    %v111 = vld [vmem:[#allocation7 + $0xbc] sm:$0xf]
    %v112 = vld [vmem:[#allocation7 + $0xc0] sm:$0xf]
    %v113 = vld [vmem:[#allocation7 + $0xc4] sm:$0xf]
    %v114 = vld [vmem:[#allocation7 + $0xc8] sm:$0xf]
    %v115 = vld [vmem:[#allocation7 + $0xcc] sm:$0xf]
    %v116 = vld [vmem:[#allocation7 + $0xd0] sm:$0xf]
    %v117 = vld [vmem:[#allocation7 + $0xd4] sm:$0xf]
    %v118 = vld [vmem:[#allocation7 + $0xd8] sm:$0xf]
    %v119 = vld [vmem:[#allocation7 + $0xdc] sm:$0xf]
    %v120 = vld [vmem:[#allocation7 + $0xe0] sm:$0xf]
    %v121 = vld [vmem:[#allocation7 + $0xe4] sm:$0xf]
    %v122 = vld [vmem:[#allocation7 + $0xe8] sm:$0xf]
    %v123 = vld [vmem:[#allocation7 + $0xec] sm:$0xf]
    %v124 = vld [vmem:[#allocation7 + $0xf0] sm:$0xf]
    %v125 = vld [vmem:[#allocation7 + $0xf4] sm:$0xf]
    %v126 = vld [vmem:[#allocation7 + $0xf8] sm:$0xf]
    %v127 = vld [vmem:[#allocation7 + $0xfc] sm:$0xf]
    %v128 = vld [vmem:[#allocation7 + $0x100] sm:$0xf]
    %v129 = vld [vmem:[#allocation7 + $0x104] sm:$0xf]
    %v130 = vld [vmem:[#allocation7 + $0x108] sm:$0xf]
    %v131 = vld [vmem:[#allocation7 + $0x10c] sm:$0xf]
    %v132 = vld [vmem:[#allocation7 + $0x110] sm:$0xf]
    %v133 = vld [vmem:[#allocation7 + $0x114] sm:$0xf]
    %v134 = vld [vmem:[#allocation7 + $0x118] sm:$0xf]
    %v135 = vld [vmem:[#allocation7 + $0x11c] sm:$0xf]
    %v136 = vld [vmem:[#allocation7 + $0x120] sm:$0xf]
    %v137 = vld [vmem:[#allocation7 + $0x124] sm:$0xf]
    %v138 = vld [vmem:[#allocation7 + $0x128] sm:$0xf]
    %v139 = vld [vmem:[#allocation7 + $0x12c] sm:$0xf]
    %v140 = vld [vmem:[#allocation7 + $0x130] sm:$0xf]
    %v141 = vld [vmem:[#allocation7 + $0x134] sm:$0xf]
    %v142 = vld [vmem:[#allocation7 + $0x138] sm:$0xf]
    %v143 = vld [vmem:[#allocation7 + $0x13c] sm:$0xf]
    %v144 = vld [vmem:[#allocation7 + $0x140] sm:$0xf]
    %v145 = vld [vmem:[#allocation7 + $0x144] sm:$0xf]
    %v146 = vld [vmem:[#allocation7 + $0x148] sm:$0xf]
    %v147 = vld [vmem:[#allocation7 + $0x14c] sm:$0xf]
    %v148 = vld [vmem:[#allocation7 + $0x150] sm:$0xf]
    %v149 = vld [vmem:[#allocation7 + $0x154] sm:$0xf]
    %v150 = vld [vmem:[#allocation7 + $0x158] sm:$0xf]
    %v151 = vld [vmem:[#allocation7 + $0x15c] sm:$0xf]
    %v152 = vld [vmem:[#allocation7 + $0x160] sm:$0xf]
    %v153 = vld [vmem:[#allocation7 + $0x164] sm:$0xf]
    %v154 = vld [vmem:[#allocation7 + $0x168] sm:$0xf]
    %v155 = vld [vmem:[#allocation7 + $0x16c] sm:$0xf]
    %v156 = vld [vmem:[#allocation7 + $0x170] sm:$0xf]
    %v157 = vld [vmem:[#allocation7 + $0x174] sm:$0xf]
    %v158 = vld [vmem:[#allocation7 + $0x178] sm:$0xf]
    %v159 = vld [vmem:[#allocation7 + $0x17c] sm:$0xf]
    %v160 = vld [vmem:[%s3] sm:$0x1]
    %v162 = vlaneseq
    %v163 = vshrl.u32 %v162, 7
    %v164 = vsub.s32 0, %v163
    %v165 = vrot.slane %v160, %v164
    %v263 = vunpack.c.l.b16 %v64
    %v264 = vunpack.c.l.b16 %v65
    %v265 = vunpack.c.l.b16 %v66
    %v266 = vunpack.c.l.b16 %v67
    %v267 = vunpack.c.l.b16 %v68
    %v268 = vunpack.c.l.b16 %v69
    %v269 = vunpack.c.l.b16 %v70
    %v270 = vunpack.c.l.b16 %v71
    %v271 = vunpack.c.l.b16 %v72
    %v272 = vunpack.c.l.b16 %v73
    %v273 = vunpack.c.l.b16 %v74
    %v274 = vunpack.c.l.b16 %v75
    %v275 = vunpack.c.l.b16 %v76
    %v276 = vunpack.c.l.b16 %v77
    %v277 = vunpack.c.l.b16 %v78
    %v278 = vunpack.c.l.b16 %v79
    %v279 = vunpack.c.l.b16 %v80
    %v280 = vunpack.c.l.b16 %v81
    %v281 = vunpack.c.l.b16 %v82
    %v282 = vunpack.c.l.b16 %v83
    %v283 = vunpack.c.l.b16 %v84
    %v284 = vunpack.c.l.b16 %v85
    %v285 = vunpack.c.l.b16 %v86
    %v286 = vunpack.c.l.b16 %v87
    %v287 = vunpack.c.l.b16 %v88
    %v288 = vunpack.c.l.b16 %v89
    %v289 = vunpack.c.l.b16 %v90
    %v290 = vunpack.c.l.b16 %v91
    %v291 = vunpack.c.l.b16 %v92
    %v292 = vunpack.c.l.b16 %v93
    %v293 = vunpack.c.l.b16 %v94
    %v294 = vunpack.c.l.b16 %v95
    %v295 = vunpack.c.l.b16 %v96
    %v296 = vunpack.c.l.b16 %v97
    %v297 = vunpack.c.l.b16 %v98
    %v298 = vunpack.c.l.b16 %v99
    %v299 = vunpack.c.l.b16 %v100
    %v300 = vunpack.c.l.b16 %v101
    %v301 = vunpack.c.l.b16 %v102
    %v302 = vunpack.c.l.b16 %v103
    %v303 = vunpack.c.l.b16 %v104
    %v304 = vunpack.c.l.b16 %v105
    %v305 = vunpack.c.l.b16 %v106
    %v306 = vunpack.c.l.b16 %v107
    %v307 = vunpack.c.l.b16 %v108
    %v308 = vunpack.c.l.b16 %v109
    %v309 = vunpack.c.l.b16 %v110
    %v310 = vunpack.c.l.b16 %v111
    %v311 = vunpack.c.l.b16 %v112
    %v312 = vunpack.c.l.b16 %v113
    %v313 = vunpack.c.l.b16 %v114
    %v314 = vunpack.c.l.b16 %v115
    %v315 = vunpack.c.l.b16 %v116
    %v316 = vunpack.c.l.b16 %v117
    %v317 = vunpack.c.l.b16 %v118
    %v318 = vunpack.c.l.b16 %v119
    %v319 = vunpack.c.l.b16 %v120
    %v320 = vunpack.c.l.b16 %v121
    %v321 = vunpack.c.l.b16 %v122
    %v322 = vunpack.c.l.b16 %v123
    %v323 = vunpack.c.l.b16 %v124
    %v324 = vunpack.c.l.b16 %v125
    %v325 = vunpack.c.l.b16 %v126
    %v326 = vunpack.c.l.b16 %v127
    %v327 = vunpack.c.l.b16 %v128
    %v328 = vunpack.c.l.b16 %v129
    %v329 = vunpack.c.l.b16 %v130
    %v330 = vunpack.c.l.b16 %v131
    %v331 = vunpack.c.l.b16 %v132
    %v332 = vunpack.c.l.b16 %v133
    %v333 = vunpack.c.l.b16 %v134
    %v334 = vunpack.c.l.b16 %v135
    %v335 = vunpack.c.l.b16 %v136
    %v336 = vunpack.c.l.b16 %v137
    %v337 = vunpack.c.l.b16 %v138
    %v338 = vunpack.c.l.b16 %v139
    %v339 = vunpack.c.l.b16 %v140
    %v340 = vunpack.c.l.b16 %v141
    %v341 = vunpack.c.l.b16 %v142
    %v342 = vunpack.c.l.b16 %v143
    %v343 = vunpack.c.l.b16 %v144
    %v344 = vunpack.c.l.b16 %v145
    %v345 = vunpack.c.l.b16 %v146
    %v346 = vunpack.c.l.b16 %v147
    %v347 = vunpack.c.l.b16 %v148
    %v348 = vunpack.c.l.b16 %v149
    %v349 = vunpack.c.l.b16 %v150
    %v350 = vunpack.c.l.b16 %v151
    %v351 = vunpack.c.l.b16 %v152
    %v352 = vunpack.c.l.b16 %v153
    %v353 = vunpack.c.l.b16 %v154
    %v354 = vunpack.c.l.b16 %v155
    %v355 = vunpack.c.l.b16 %v156
    %v356 = vunpack.c.l.b16 %v157
    %v357 = vunpack.c.l.b16 %v158
    %v358 = vunpack.c.l.b16 %v159
    %v359 = vpack.c.b16 %v264, %v263
    %v360 = vpack.c.b16 %v266, %v265
    %v361 = vpack.c.b16 %v268, %v267
    %v362 = vpack.c.b16 %v270, %v269
    %v363 = vpack.c.b16 %v272, %v271
    %v364 = vpack.c.b16 %v274, %v273
    %v365 = vpack.c.b16 %v276, %v275
    %v366 = vpack.c.b16 %v278, %v277
    %v367 = vpack.c.b16 %v280, %v279
    %v368 = vpack.c.b16 %v282, %v281
    %v369 = vpack.c.b16 %v284, %v283
    %v370 = vpack.c.b16 %v286, %v285
    %v371 = vpack.c.b16 %v288, %v287
    %v372 = vpack.c.b16 %v290, %v289
    %v373 = vpack.c.b16 %v292, %v291
    %v374 = vpack.c.b16 %v294, %v293
    %v375 = vpack.c.b16 %v296, %v295
    %v376 = vpack.c.b16 %v298, %v297
    %v377 = vpack.c.b16 %v300, %v299
    %v378 = vpack.c.b16 %v302, %v301
    %v379 = vpack.c.b16 %v304, %v303
    %v380 = vpack.c.b16 %v306, %v305
    %v381 = vpack.c.b16 %v308, %v307
    %v382 = vpack.c.b16 %v310, %v309
    %v383 = vpack.c.b16 %v312, %v311
    %v384 = vpack.c.b16 %v314, %v313
    %v385 = vpack.c.b16 %v316, %v315
    %v386 = vpack.c.b16 %v318, %v317
    %v387 = vpack.c.b16 %v320, %v319
    %v388 = vpack.c.b16 %v322, %v321
    %v389 = vpack.c.b16 %v324, %v323
    %v390 = vpack.c.b16 %v326, %v325
    %v391 = vpack.c.b16 %v328, %v327
    %v392 = vpack.c.b16 %v330, %v329
    %v393 = vpack.c.b16 %v332, %v331
    %v394 = vpack.c.b16 %v334, %v333
    %v395 = vpack.c.b16 %v336, %v335
    %v396 = vpack.c.b16 %v338, %v337
    %v397 = vpack.c.b16 %v340, %v339
    %v398 = vpack.c.b16 %v342, %v341
    %v399 = vpack.c.b16 %v344, %v343
    %v400 = vpack.c.b16 %v346, %v345
    %v401 = vpack.c.b16 %v348, %v347
    %v402 = vpack.c.b16 %v350, %v349
    %v403 = vpack.c.b16 %v352, %v351
    %v404 = vpack.c.b16 %v354, %v353
    %v405 = vpack.c.b16 %v356, %v355
    %v406 = vpack.c.b16 %v358, %v357
    %455 = vmatprep.subr.bf16.mxu0 0
    %456 = vmatpush1.bf16.msra.mxu0 %v359
    %457 = vmatprep.subr.bf16.mxu0 0
    %458 = vmatpush1.bf16.msra.mxu0 %v360
    %459 = vmatprep.subr.bf16.mxu0 0
    %460 = vmatpush1.bf16.msra.mxu0 %v361
    %461 = vmatprep.subr.bf16.mxu0 0
    %462 = vmatpush1.bf16.msra.mxu0 %v362
    %463 = vmatprep.subr.bf16.mxu0 0
    %464 = vmatpush1.bf16.msra.mxu0 %v363
    %465 = vmatprep.subr.bf16.mxu0 0
    %466 = vmatpush1.bf16.msra.mxu0 %v364
    %467 = vmatprep.subr.bf16.mxu0 0
    %468 = vmatpush1.bf16.msra.mxu0 %v365
    %469 = vmatprep.subr.bf16.mxu0 0
    %470 = vmatpush1.bf16.msra.mxu0 %v366
    %471 = vmatprep.subr.bf16.mxu0 0
    %472 = vmatpush1.bf16.msra.mxu0 %v367
    %473 = vmatprep.subr.bf16.mxu0 0
    %474 = vmatpush1.bf16.msra.mxu0 %v368
    %475 = vmatprep.subr.bf16.mxu0 0
    %476 = vmatpush1.bf16.msra.mxu0 %v369
    %477 = vmatprep.subr.bf16.mxu0 0
    %478 = vmatpush1.bf16.msra.mxu0 %v370
    %479 = vmatprep.subr.bf16.mxu0 0
    %480 = vmatpush1.bf16.msra.mxu0 %v371
    %481 = vmatprep.subr.bf16.mxu0 0
    %482 = vmatpush1.bf16.msra.mxu0 %v372
    %483 = vmatprep.subr.bf16.mxu0 0
    %484 = vmatpush1.bf16.msra.mxu0 %v373
    %485 = vmatprep.subr.bf16.mxu0 0
    %486 = vmatpush1.bf16.msra.mxu0 %v374
    %487 = vmatprep.mubr.bf16.mxu0 %v59
    %488 = vmatmul.mubr.bf16.gmra.mrb[0].mxu0 %v58
    %v489 = vpop.f32.mrb[0].mxu0
    %v490 = vadd.f32 %v165, %v489
    %v491 = vpop.f32.mrb[0].mxu0
    %v492 = vpop.f32.mrb[0].mxu0
    %v493 = vadd.f32 %v165, %v492
    %v494 = vpop.f32.mrb[0].mxu0
    %495 = vdwg.mxu0
    %496 = vmatprep.subr.bf16.mxu0 0
    %497 = vmatpush1.bf16.msra.mxu0 %v375
    %498 = vmatprep.subr.bf16.mxu0 0
    %499 = vmatpush1.bf16.msra.mxu0 %v376
    %500 = vmatprep.subr.bf16.mxu0 0
    %501 = vmatpush1.bf16.msra.mxu0 %v377
    %502 = vmatprep.subr.bf16.mxu0 0
    %503 = vmatpush1.bf16.msra.mxu0 %v378
    %504 = vmatprep.subr.bf16.mxu0 0
    %505 = vmatpush1.bf16.msra.mxu0 %v379
    %506 = vmatprep.subr.bf16.mxu0 0
    %507 = vmatpush1.bf16.msra.mxu0 %v380
    %508 = vmatprep.subr.bf16.mxu0 0
    %509 = vmatpush1.bf16.msra.mxu0 %v381
    %510 = vmatprep.subr.bf16.mxu0 0
    %511 = vmatpush1.bf16.msra.mxu0 %v382
    %512 = vmatprep.subr.bf16.mxu0 0
    %513 = vmatpush1.bf16.msra.mxu0 %v383
    %514 = vmatprep.subr.bf16.mxu0 0
    %515 = vmatpush1.bf16.msra.mxu0 %v384
    %516 = vmatprep.subr.bf16.mxu0 0
    %517 = vmatpush1.bf16.msra.mxu0 %v385
    %518 = vmatprep.subr.bf16.mxu0 0
    %519 = vmatpush1.bf16.msra.mxu0 %v386
    %520 = vmatprep.subr.bf16.mxu0 0
    %521 = vmatpush1.bf16.msra.mxu0 %v387
    %522 = vmatprep.subr.bf16.mxu0 0
    %523 = vmatpush1.bf16.msra.mxu0 %v388
    %524 = vmatprep.subr.bf16.mxu0 0
    %525 = vmatpush1.bf16.msra.mxu0 %v389
    %526 = vmatprep.subr.bf16.mxu0 0
    %527 = vmatpush1.bf16.msra.mxu0 %v390
    %528 = vmatprep.mubr.bf16.mxu0 %v61
    %529 = vmatmul.mubr.bf16.gmra.mrb[0].mxu0 %v60
    %v530 = vpop.f32.mrb[0].mxu0
    %v531 = vadd.f32 %v490, %v530
    %v532 = vpop.f32.mrb[0].mxu0
    %v533 = vpop.f32.mrb[0].mxu0
    %v534 = vadd.f32 %v493, %v533
    %v535 = vpop.f32.mrb[0].mxu0
    %536 = vdwg.mxu0
    %537 = vmatprep.subr.bf16.mxu0 0
    %538 = vmatpush1.bf16.msra.mxu0 %v391
    %539 = vmatprep.subr.bf16.mxu0 0
    %540 = vmatpush1.bf16.msra.mxu0 %v392
    %541 = vmatprep.subr.bf16.mxu0 0
    %542 = vmatpush1.bf16.msra.mxu0 %v393
    %543 = vmatprep.subr.bf16.mxu0 0
    %544 = vmatpush1.bf16.msra.mxu0 %v394
    %545 = vmatprep.subr.bf16.mxu0 0
    %546 = vmatpush1.bf16.msra.mxu0 %v395
    %547 = vmatprep.subr.bf16.mxu0 0
    %548 = vmatpush1.bf16.msra.mxu0 %v396
    %549 = vmatprep.subr.bf16.mxu0 0
    %550 = vmatpush1.bf16.msra.mxu0 %v397
    %551 = vmatprep.subr.bf16.mxu0 0
    %552 = vmatpush1.bf16.msra.mxu0 %v398
    %553 = vmatprep.subr.bf16.mxu0 0
    %554 = vmatpush1.bf16.msra.mxu0 %v399
    %555 = vmatprep.subr.bf16.mxu0 0
    %556 = vmatpush1.bf16.msra.mxu0 %v400
    %557 = vmatprep.subr.bf16.mxu0 0
    %558 = vmatpush1.bf16.msra.mxu0 %v401
    %559 = vmatprep.subr.bf16.mxu0 0
    %560 = vmatpush1.bf16.msra.mxu0 %v402
    %561 = vmatprep.subr.bf16.mxu0 0
    %562 = vmatpush1.bf16.msra.mxu0 %v403
    %563 = vmatprep.subr.bf16.mxu0 0
    %564 = vmatpush1.bf16.msra.mxu0 %v404
    %565 = vmatprep.subr.bf16.mxu0 0
    %566 = vmatpush1.bf16.msra.mxu0 %v405
    %567 = vmatprep.subr.bf16.mxu0 0
    %568 = vmatpush1.bf16.msra.mxu0 %v406
    %569 = vmatprep.mubr.bf16.mxu0 %v63
    %570 = vmatmul.mubr.bf16.gmra.mrb[0].mxu0 %v62
    %v571 = vpop.f32.mrb[0].mxu0
    %v572 = vadd.f32 %v531, %v571
    %v573 = vpop.f32.mrb[0].mxu0
    %v574 = vpop.f32.mrb[0].mxu0
    %v575 = vadd.f32 %v534, %v574
    %v576 = vpop.f32.mrb[0].mxu0
    %577 = vdwg.mxu0
    %578 = vst [vmem:[#allocation9] sm:$0xff] %v572
    %579 = vst [vmem:[#allocation9 + $0x8] sm:$0xff] %v575
    // Predicated region
    $region22: #{tpu_custom_call.1} parent=1 // pred_check
      _
    $region23: #{tpu_custom_call.1} parent=1 // pred_check_branch
      %581 = sbr.rel (0) target = $region25
    $region24: #{tpu_custom_call.1} parent=1 // pred_region
      %s583 = ssub.s32 256, 256
      %584 = vsyncadd [#allocation6], %s583
      %s585 = sshll.u32 [#allocation9], 4
      %s586 = int_to_ptr.vmem [resolvable:$true] %s585
      %591 = dma.vmem_to_hbm [thread:$0]  %s586, 256, %s4, [#allocation6], 128, 128, 8
    $region25: #{tpu_custom_call.1} parent=1 // pred_fallthru
      _
    // Predicated region
    $region26: #{tpu_custom_call.1} parent=1 // pred_check
      _
    $region27: #{tpu_custom_call.1} parent=1 // pred_check_branch
      %593 = sbr.rel (0) target = $region29
    $region28: #{tpu_custom_call.1} parent=1 // pred_region
      %594 = dma.done [#allocation6], 256
    $region29: #{tpu_custom_call.1} parent=1 // pred_fallthru
      _
    %595 = vsyncpa [#allocation5], 1
    %596 = vsyncpa [#allocation8], 1
    %597 = vsyncpa [#allocation6], 1

</llo_original>
